<compile_context>
chip_gen: v5e
topology: v5e:2x2
jax: 0.10.0
libtpu: 0.0.40
codegen_flags: <defaults>
</compile_context>

<pallas_src>
import functools

import jax
import jax.numpy as jnp
import numpy as np
from jax.experimental import pallas as pl
from jax.experimental.pallas import tpu as pltpu


_NEG_INF = -1e30  # finite "minus infinity": avoids inf/nan arithmetic on masked lanes


def _round_up(x, m):
    return (x + m - 1) // m * m


def _cdiv(a, b):
    return -(-a // b)


def _choose_vocab_tile(V, cap):
    """Lane-tile for the vocab axis: always a multiple of 128."""
    cap = max(128, (cap // 128) * 128)
    if V <= cap:
        return _round_up(V, 128)
    # Prefer the largest 128-multiple divisor of V (no partial boundary block).
    for cand in range(cap, 127, -128):
        if V % cand == 0:
            return cand
    return cap  # fall back to a partial last tile + in-kernel lane masking


def _seq_ce_kernel(logits_ref, targets_ref, mask_ref, out_ref,
                   m_sc, l_sc, xt_sc, sx_sc, *,
                   label_smoothing, num_classes, vocab_tile, mask_lanes):
    """Cross entropy over a (TM, TV) logits tile with online logsumexp.

    Grid = (row_tiles, vocab_tiles); vocab is the trailing reduction axis.
    Scratch accumulators, all (TM, 1) f32:
      m_sc : running max(x)
      l_sc : running sum(exp(x - m))
      xt_sc: running x[target]  (one-hot select; only one vocab tile contributes)
      sx_sc: running sum(x)     (used only for label smoothing)
    """
    j = pl.program_id(1)
    nv = pl.num_programs(1)

    @pl.when(j == 0)
    def _init():
        m_sc[...] = jnp.full_like(m_sc, _NEG_INF)
        l_sc[...] = jnp.zeros_like(l_sc)
        xt_sc[...] = jnp.zeros_like(xt_sc)
        sx_sc[...] = jnp.zeros_like(sx_sc)

    x = logits_ref[...].astype(jnp.float32)      # (TM, TV) — cast in-kernel (bf16 ok)
    tgt = targets_ref[...]                       # (TM, 1) int32

    # Global class index of every lane in this vocab tile.
    col = jax.lax.broadcasted_iota(jnp.int32, x.shape, 1) + j * vocab_tile

    if mask_lanes:
        valid = col < num_classes
        x_safe = jnp.where(valid, x, _NEG_INF)   # kill padded / partial-block lanes
    else:
        x_safe = x

    # ---- online logsumexp update (single sweep over the tile) ----
    m_prev = m_sc[...]
    m_new = jnp.maximum(m_prev, jnp.max(x_safe, axis=-1, keepdims=True))
    alpha = jnp.exp(m_prev - m_new)
    p_sum = jnp.sum(jnp.exp(x_safe - m_new), axis=-1, keepdims=True)
    l_sc[...] = alpha * l_sc[...] + p_sum
    m_sc[...] = m_new

    # x[target] via one-hot select (masked lanes can never match since tgt < V).
    xt_sc[...] += jnp.sum(jnp.where(col == tgt, x, 0.0), axis=-1, keepdims=True)

    if label_smoothing > 0.0:
        if mask_lanes:
            sx_sc[...] += jnp.sum(jnp.where(valid, x, 0.0), axis=-1, keepdims=True)
        else:
            sx_sc[...] += jnp.sum(x, axis=-1, keepdims=True)

    @pl.when(j == nv - 1)
    def _finalize():
        lse = m_sc[...] + jnp.log(l_sc[...])     # (TM, 1)
        if label_smoothing > 0.0:
            ls = label_smoothing
            nll = ((1.0 - ls) * (lse - xt_sc[...])
                   + (ls / float(num_classes))
                   * (float(num_classes) * lse - sx_sc[...]))
        else:
            nll = lse - xt_sc[...]
        loss_col = nll * mask_ref[...]           # (TM, 1)

        # Lane-dense store: convert the (TM, 1) column into a (1, TM) row via a
        # diagonal select + sublane reduction (cheap once per row tile; avoids
        # relying on a (TM,1)->(1,TM) relayout).  Output last dim == TM -> wide,
        # unmasked vector stores.
        tm = loss_col.shape[0]
        r = jax.lax.broadcasted_iota(jnp.int32, (tm, tm), 0)
        c = jax.lax.broadcasted_iota(jnp.int32, (tm, tm), 1)
        row = jnp.sum(jnp.where(r == c, loss_col, 0.0), axis=0, keepdims=True)
        out_ref[...] = row[None]                 # (1, 1, TM)


def sequence_cross_entropy_with_logits(logits, targets, mask,
                                       label_smoothing=-1, reduce=None,
                                       *, max_vocab_tile=8192,
                                       max_row_tile=512,
                                       tile_elem_budget=1 << 20,
                                       vmem_limit_bytes=48 * 1024 * 1024):
    """Pallas implementation of the PyTorch reference (forward pass)."""
    B, T, V = logits.shape
    N = B * T

    logits_flat = logits.reshape(N, V)                    # keep dtype (bf16 stays bf16)
    targets_col = targets.reshape(N, 1).astype(jnp.int32)
    mask_col = mask.reshape(N, 1).astype(jnp.float32)

    # ---- vocab (lane) tiling ----
    TV = _choose_vocab_tile(V, max_vocab_tile)
    if TV > V:  # small, non-128-multiple vocab: pad once with zeros (masked in-kernel)
        logits_flat = jnp.pad(logits_flat, ((0, 0), (0, TV - V)))
    V_arr = logits_flat.shape[1]
    nv = _cdiv(V_arr, TV)                                  # last tile may be partial
    mask_lanes = (nv * TV != V)

    # ---- row (sublane) tiling, sized to a conservative per-buffer VMEM budget ----
    TM = max(8, min(max_row_tile, (tile_elem_budget // TV) // 8 * 8))
    TM = min(TM, _round_up(N, 8))
    n_row_tiles = _cdiv(N, TM)
    N_pad = n_row_tiles * TM
    if N_pad != N:  # pad rows with zeros (mask=0 -> padded rows contribute nothing)
        pad = N_pad - N
        logits_flat = jnp.pad(logits_flat, ((0, pad), (0, 0)))
        targets_col = jnp.pad(targets_col, ((0, pad), (0, 0)))
        mask_col = jnp.pad(mask_col, ((0, pad), (0, 0)))

    kernel = functools.partial(
        _seq_ce_kernel,
        label_smoothing=float(label_smoothing),
        num_classes=int(V),
        vocab_tile=int(TV),
        mask_lanes=bool(mask_lanes),
    )

    out = pl.pallas_call(
        kernel,
        out_shape=jax.ShapeDtypeStruct((n_row_tiles, 1, TM), jnp.float32),
        grid_spec=pltpu.PrefetchScalarGridSpec(
            num_scalar_prefetch=0,
            grid=(n_row_tiles, nv),                        # vocab (reduction) axis last
            in_specs=[
                pl.BlockSpec((TM, TV), lambda i, j: (i, j)),
                pl.BlockSpec((TM, 1), lambda i, j: (i, 0)),
                pl.BlockSpec((TM, 1), lambda i, j: (i, 0)),
            ],
            out_specs=pl.BlockSpec((1, 1, TM), lambda i, j: (i, 0, 0)),
            scratch_shapes=[
                pltpu.VMEM((TM, 1), jnp.float32),          # running max
                pltpu.VMEM((TM, 1), jnp.float32),          # running sum(exp)
                pltpu.VMEM((TM, 1), jnp.float32),          # running x[target]
                pltpu.VMEM((TM, 1), jnp.float32),          # running sum(x)
            ],
        ),
        compiler_params=pltpu.CompilerParams(
            dimension_semantics=("parallel", "arbitrary"),
            vmem_limit_bytes=vmem_limit_bytes,
        ),
    )(logits_flat, targets_col, mask_col)

    loss = out.reshape(N_pad)[:N].reshape(B, T)
    if reduce:
        mask_f = mask.astype(jnp.float32)
        loss = loss.sum(axis=1) / (mask_f.sum(axis=1) + 1e-13)
        if reduce == "batch":
            loss = loss.mean()
    return loss


class SequenceCrossEntropyLoss:
    """Drop-in mirror of the PyTorch module's forward."""

    def __call__(self, logits, targets, mask, label_smoothing=-1, reduce=None):
        return sequence_cross_entropy_with_logits(
            logits, targets, mask, label_smoothing, reduce)


def _reference(logits, targets, mask, label_smoothing=-1, reduce=None):
    # Pure-JAX reference mirroring the torch code.
    B, T, V = logits.shape
    lp = jax.nn.log_softmax(logits.reshape(-1, V).astype(jnp.float32), axis=-1)
    tgt = targets.reshape(-1)
    if label_smoothing > 0.0:
        sm = label_smoothing / float(V)
        oh = jax.nn.one_hot(tgt, V, dtype=jnp.float32) * (1.0 - label_smoothing) + sm
        nll = -(lp * oh).sum(-1)
    else:
        nll = -jnp.take_along_axis(lp, tgt[:, None], axis=1)[:, 0]
    loss = nll.reshape(B, T) * mask.astype(jnp.float32)
    if reduce:
        loss = loss.sum(1) / (mask.astype(jnp.float32).sum(1) + 1e-13)
        if reduce == "batch":
            loss = loss.mean()
    return loss


if __name__ == "__main__":
    loss_fn = SequenceCrossEntropyLoss()

    # Case 1: small canonical shapes (single vocab tile, no masking, no padding).
    k1, k2, k3 = jax.random.split(jax.random.PRNGKey(0), 3)
    B, T, V = 2, 8, 128
    logits = jax.random.normal(k1, (B, T, V), dtype=jnp.float32)
    targets = jax.random.randint(k2, (B, T), 0, V, dtype=jnp.int32)
    mask = (jax.random.uniform(k3, (B, T)) > 0.25).astype(jnp.float32)

    out = jax.block_until_ready(loss_fn(logits, targets, mask))
    ref = _reference(logits, targets, mask)
    assert out.shape == (B, T)
    np.testing.assert_allclose(np.asarray(out), np.asarray(ref), rtol=1e-5, atol=1e-5)

    out_ls = jax.block_until_ready(
        loss_fn(logits, targets, mask, label_smoothing=0.1, reduce="batch"))
    ref_ls = _reference(logits, targets, mask, label_smoothing=0.1, reduce="batch")
    np.testing.assert_allclose(np.asarray(out_ls), np.asarray(ref_ls), rtol=1e-5, atol=1e-5)

    # Case 2: tiled-vocab online-logsumexp path (3 vocab tiles, partial last tile,
    # lane masking) + row padding (N=15 -> 16).
    k4, k5, k6 = jax.random.split(jax.random.PRNGKey(1), 3)
    B2, T2, V2 = 3, 5, 320
    logits2 = jax.random.normal(k4, (B2, T2, V2), dtype=jnp.float32)
    targets2 = jax.random.randint(k5, (B2, T2), 0, V2, dtype=jnp.int32)
    mask2 = (jax.random.uniform(k6, (B2, T2)) > 0.5).astype(jnp.float32)

    out2 = jax.block_until_ready(
        sequence_cross_entropy_with_logits(logits2, targets2, mask2, max_vocab_tile=128))
    ref2 = _reference(logits2, targets2, mask2)
    np.testing.assert_allclose(np.asarray(out2), np.asarray(ref2), rtol=1e-5, atol=1e-5)

    out2s = jax.block_until_ready(
        sequence_cross_entropy_with_logits(logits2, targets2, mask2,
                                           label_smoothing=0.1, reduce="sentence",
                                           max_vocab_tile=128))
    ref2s = _reference(logits2, targets2, mask2, label_smoothing=0.1, reduce="sentence")
    np.testing.assert_allclose(np.asarray(out2s), np.asarray(ref2s), rtol=1e-5, atol=1e-5)

    # Case 3: vocab not a multiple of 128 (padded + masked lanes).
    k7, k8, k9 = jax.random.split(jax.random.PRNGKey(2), 3)
    B3, T3, V3 = 2, 8, 100
    logits3 = jax.random.normal(k7, (B3, T3, V3), dtype=jnp.float32)
    targets3 = jax.random.randint(k8, (B3, T3), 0, V3, dtype=jnp.int32)
    mask3 = (jax.random.uniform(k9, (B3, T3)) > 0.25).astype(jnp.float32)
    out3 = jax.block_until_ready(loss_fn(logits3, targets3, mask3))
    ref3 = _reference(logits3, targets3, mask3)
    np.testing.assert_allclose(np.asarray(out3), np.asarray(ref3), rtol=1e-5, atol=1e-5)

    # Case 4: bf16 logits pass-through (cast to f32 inside the kernel only).
    logits_bf16 = logits.astype(jnp.bfloat16)
    out_bf = jax.block_until_ready(loss_fn(logits_bf16, targets, mask))
    ref_bf = _reference(logits_bf16.astype(jnp.float32), targets, mask)
    np.testing.assert_allclose(np.asarray(out_bf), np.asarray(ref_bf), rtol=1e-4, atol=1e-4)

    print("KERNEL_OK")
</pallas_src>

<mosaic_0001>
module attributes {stable_mosaic.version = 11 : i64} {
  func.func @_seq_ce_kernel(%arg0: i32, %arg1: i32, %arg2: memref<16x128xf32, #tpu.memory_space<vmem>>, %arg3: memref<16x1xi32, #tpu.memory_space<vmem>>, %arg4: memref<16x1xf32, #tpu.memory_space<vmem>>, %arg5: memref<1x1x16xf32, #tpu.memory_space<vmem>>, %arg6: memref<16x1xf32, #tpu.memory_space<vmem>>, %arg7: memref<16x1xf32, #tpu.memory_space<vmem>>, %arg8: memref<16x1xf32, #tpu.memory_space<vmem>>, %arg9: memref<16x1xf32, #tpu.memory_space<vmem>>) attributes {dimension_semantics = [#tpu.dimension_semantics<parallel>, #tpu.dimension_semantics<arbitrary>], iteration_bounds = array<i64: 1, 1>, scalar_prefetch = 0 : i64, scratch_operands = 4 : i64, tpu.core_type = #tpu.core_type<tc>, window_params = [{transform_indices = @transform_0, window_bounds = array<i64: 16, 128>}, {transform_indices = @transform_1, window_bounds = array<i64: 16, 1>}, {transform_indices = @transform_2, window_bounds = array<i64: 16, 1>}, {transform_indices = @transform_3, window_bounds = array<i64: 1, 1, 16>}]} {
    %c0_i32 = arith.constant 0 : i32
    %0 = arith.cmpi eq, %arg1, %c0_i32 : i32
    %1 = arith.extui %0 : i1 to i32
    %c0_i32_0 = arith.constant 0 : i32
    %2 = arith.cmpi ne, %1, %c0_i32_0 : i32
    scf.if %2 {
      %cst_21 = arith.constant -1.000000e+30 : f32
      %37 = vector.broadcast %cst_21 : f32 to vector<16x1xf32>
      %c0_22 = arith.constant 0 : index
      %c0_23 = arith.constant 0 : index
      %38 = vector.load %arg6[%c0_22, %c0_23] : memref<16x1xf32, #tpu.memory_space<vmem>>, vector<16x1xf32>
      tpu.vector_store %arg6[%c0_22, %c0_23], %37 {strides = array<i32>} : memref<16x1xf32, #tpu.memory_space<vmem>>, vector<16x1xf32>,
      %cst_24 = arith.constant 0.000000e+00 : f32
      %39 = vector.broadcast %cst_24 : f32 to vector<16x1xf32>
      %c0_25 = arith.constant 0 : index
      %c0_26 = arith.constant 0 : index
      %40 = vector.load %arg7[%c0_25, %c0_26] : memref<16x1xf32, #tpu.memory_space<vmem>>, vector<16x1xf32>
      tpu.vector_store %arg7[%c0_25, %c0_26], %39 {strides = array<i32>} : memref<16x1xf32, #tpu.memory_space<vmem>>, vector<16x1xf32>,
      %cst_27 = arith.constant 0.000000e+00 : f32
      %41 = vector.broadcast %cst_27 : f32 to vector<16x1xf32>
      %c0_28 = arith.constant 0 : index
      %c0_29 = arith.constant 0 : index
      %42 = vector.load %arg8[%c0_28, %c0_29] : memref<16x1xf32, #tpu.memory_space<vmem>>, vector<16x1xf32>
      tpu.vector_store %arg8[%c0_28, %c0_29], %41 {strides = array<i32>} : memref<16x1xf32, #tpu.memory_space<vmem>>, vector<16x1xf32>,
      %cst_30 = arith.constant 0.000000e+00 : f32
      %43 = vector.broadcast %cst_30 : f32 to vector<16x1xf32>
      %c0_31 = arith.constant 0 : index
      %c0_32 = arith.constant 0 : index
      %44 = vector.load %arg9[%c0_31, %c0_32] : memref<16x1xf32, #tpu.memory_space<vmem>>, vector<16x1xf32>
      tpu.vector_store %arg9[%c0_31, %c0_32], %43 {strides = array<i32>} : memref<16x1xf32, #tpu.memory_space<vmem>>, vector<16x1xf32>,
    } else {
    }
    %c0 = arith.constant 0 : index
    %c0_1 = arith.constant 0 : index
    %3 = vector.load %arg2[%c0, %c0_1] : memref<16x128xf32, #tpu.memory_space<vmem>>, vector<16x128xf32>
    %c0_2 = arith.constant 0 : index
    %c0_3 = arith.constant 0 : index
    %4 = vector.load %arg3[%c0_2, %c0_3] : memref<16x1xi32, #tpu.memory_space<vmem>>, vector<16x1xi32>
    %5 = tpu.iota {dimensions = array<i32: 1>} : vector<16x128xi32>
    %c128_i32 = arith.constant 128 : i32
    %6 = arith.muli %arg1, %c128_i32 : i32
    %7 = vector.broadcast %6 : i32 to vector<16x128xi32>
    %8 = arith.addi %5, %7 : vector<16x128xi32>
    %c0_4 = arith.constant 0 : index
    %c0_5 = arith.constant 0 : index
    %9 = vector.load %arg6[%c0_4, %c0_5] : memref<16x1xf32, #tpu.memory_space<vmem>>, vector<16x1xf32>
    %cst = arith.constant dense<0xFF800000> : vector<16xf32>
    %10 = vector.multi_reduction <maximumf>, %3, %cst [1] : vector<16x128xf32> to vector<16xf32>
    %11 = vector.shape_cast %10 : vector<16xf32> to vector<16x1xf32>
    %12 = arith.maximumf %9, %11 : vector<16x1xf32>
    %13 = arith.subf %9, %12 : vector<16x1xf32>
    %14 = math.exp %13 : vector<16x1xf32>
    %15 = vector.broadcast %12 : vector<16x1xf32> to vector<16x128xf32>
    %16 = arith.subf %3, %15 : vector<16x128xf32>
    %17 = math.exp %16 : vector<16x128xf32>
    %cst_6 = arith.constant dense<0.000000e+00> : vector<16xf32>
    %18 = vector.multi_reduction <add>, %17, %cst_6 [1] : vector<16x128xf32> to vector<16xf32>
    %19 = vector.shape_cast %18 : vector<16xf32> to vector<16x1xf32>
    %c0_7 = arith.constant 0 : index
    %c0_8 = arith.constant 0 : index
    %20 = vector.load %arg7[%c0_7, %c0_8] : memref<16x1xf32, #tpu.memory_space<vmem>>, vector<16x1xf32>
    %21 = arith.mulf %14, %20 : vector<16x1xf32>
    %22 = arith.addf %21, %19 : vector<16x1xf32>
    %c0_9 = arith.constant 0 : index
    %c0_10 = arith.constant 0 : index
    %23 = vector.load %arg7[%c0_9, %c0_10] : memref<16x1xf32, #tpu.memory_space<vmem>>, vector<16x1xf32>
    tpu.vector_store %arg7[%c0_9, %c0_10], %22 {strides = array<i32>} : memref<16x1xf32, #tpu.memory_space<vmem>>, vector<16x1xf32>,
    %c0_11 = arith.constant 0 : index
    %c0_12 = arith.constant 0 : index
    %24 = vector.load %arg6[%c0_11, %c0_12] : memref<16x1xf32, #tpu.memory_space<vmem>>, vector<16x1xf32>
    tpu.vector_store %arg6[%c0_11, %c0_12], %12 {strides = array<i32>} : memref<16x1xf32, #tpu.memory_space<vmem>>, vector<16x1xf32>,
    %c0_13 = arith.constant 0 : index
    %c0_14 = arith.constant 0 : index
    %25 = vector.load %arg8[%c0_13, %c0_14] : memref<16x1xf32, #tpu.memory_space<vmem>>, vector<16x1xf32>
    %26 = vector.broadcast %4 : vector<16x1xi32> to vector<16x128xi32>
    %27 = arith.cmpi eq, %8, %26 : vector<16x128xi32>
    %cst_15 = arith.constant 0.000000e+00 : f32
    %28 = vector.broadcast %cst_15 : f32 to vector<16x128xf32>
    %29 = arith.select %27, %3, %28 : vector<16x128xi1>, vector<16x128xf32>
    %cst_16 = arith.constant dense<0.000000e+00> : vector<16xf32>
    %30 = vector.multi_reduction <add>, %29, %cst_16 [1] : vector<16x128xf32> to vector<16xf32>
    %31 = vector.shape_cast %30 : vector<16xf32> to vector<16x1xf32>
    %32 = arith.addf %25, %31 : vector<16x1xf32>
    %c0_17 = arith.constant 0 : index
    %c0_18 = arith.constant 0 : index
    %33 = vector.load %arg8[%c0_17, %c0_18] : memref<16x1xf32, #tpu.memory_space<vmem>>, vector<16x1xf32>
    tpu.vector_store %arg8[%c0_17, %c0_18], %32 {strides = array<i32>} : memref<16x1xf32, #tpu.memory_space<vmem>>, vector<16x1xf32>,
    %c0_i32_19 = arith.constant 0 : i32
    %34 = arith.cmpi eq, %arg1, %c0_i32_19 : i32
    %35 = arith.extui %34 : i1 to i32
    %c0_i32_20 = arith.constant 0 : i32
    %36 = arith.cmpi ne, %35, %c0_i32_20 : i32
    scf.if %36 {
      %c0_21 = arith.constant 0 : index
      %c0_22 = arith.constant 0 : index
      %37 = vector.load %arg6[%c0_21, %c0_22] : memref<16x1xf32, #tpu.memory_space<vmem>>, vector<16x1xf32>
      %c0_23 = arith.constant 0 : index
      %c0_24 = arith.constant 0 : index
      %38 = vector.load %arg7[%c0_23, %c0_24] : memref<16x1xf32, #tpu.memory_space<vmem>>, vector<16x1xf32>
      %39 = math.log %38 : vector<16x1xf32>
      %40 = arith.addf %37, %39 : vector<16x1xf32>
      %c0_25 = arith.constant 0 : index
      %c0_26 = arith.constant 0 : index
      %41 = vector.load %arg8[%c0_25, %c0_26] : memref<16x1xf32, #tpu.memory_space<vmem>>, vector<16x1xf32>
      %42 = arith.subf %40, %41 : vector<16x1xf32>
      %c0_27 = arith.constant 0 : index
      %c0_28 = arith.constant 0 : index
      %43 = vector.load %arg4[%c0_27, %c0_28] : memref<16x1xf32, #tpu.memory_space<vmem>>, vector<16x1xf32>
      %44 = arith.mulf %42, %43 : vector<16x1xf32>
      %45 = tpu.iota {dimensions = array<i32: 0>} : vector<16x16xi32>
      %46 = tpu.iota {dimensions = array<i32: 1>} : vector<16x16xi32>
      %47 = arith.cmpi eq, %45, %46 : vector<16x16xi32>
      %cst_29 = arith.constant 0.000000e+00 : f32
      %48 = vector.shape_cast %44 : vector<16x1xf32> to vector<16x1xf32>
      %49 = vector.broadcast %48 : vector<16x1xf32> to vector<16x16xf32>
      %50 = vector.broadcast %cst_29 : f32 to vector<16x16xf32>
      %51 = arith.select %47, %49, %50 : vector<16x16xi1>, vector<16x16xf32>
      %cst_30 = arith.constant dense<0.000000e+00> : vector<16xf32>
      %52 = vector.multi_reduction <add>, %51, %cst_30 [0] : vector<16x16xf32> to vector<16xf32>
      %53 = vector.shape_cast %52 : vector<16xf32> to vector<1x16xf32>
      %54 = vector.shape_cast %53 : vector<1x16xf32> to vector<1x1x16xf32>
      %c0_31 = arith.constant 0 : index
      %c0_32 = arith.constant 0 : index
      %c0_33 = arith.constant 0 : index
      %55 = vector.load %arg5[%c0_31, %c0_32, %c0_33] : memref<1x1x16xf32, #tpu.memory_space<vmem>>, vector<1x1x16xf32>
      tpu.vector_store %arg5[%c0_31, %c0_32, %c0_33], %54 {strides = array<i32>} : memref<1x1x16xf32, #tpu.memory_space<vmem>>, vector<1x1x16xf32>,
    } else {
    }
    return
  }
  func.func @transform_0(%arg0: i32, %arg1: i32) -> (i32, i32) {
    %c0_i32 = arith.constant 0 : i32
    return %arg0, %arg1 : i32, i32
  }
  func.func @transform_1(%arg0: i32, %arg1: i32) -> (i32, i32) {
    %c0_i32 = arith.constant 0 : i32
    %c0_i32_0 = arith.constant 0 : i32
    return %arg0, %c0_i32 : i32, i32
  }
  func.func @transform_2(%arg0: i32, %arg1: i32) -> (i32, i32) {
    %c0_i32 = arith.constant 0 : i32
    %c0_i32_0 = arith.constant 0 : i32
    return %arg0, %c0_i32 : i32, i32
  }
  func.func @transform_3(%arg0: i32, %arg1: i32) -> (i32, i32, i32) {
    %c0_i32 = arith.constant 0 : i32
    %c0_i32_0 = arith.constant 0 : i32
    %c0_i32_1 = arith.constant 0 : i32
    return %arg0, %c0_i32, %c0_i32_0 : i32, i32, i32
  }
}

</mosaic_0001>

<llo_original>
// kernel: tpu_custom_call.1
$region0: #{tpu_custom_call.1}
  #allocation0 [shape = 'u32[]', space=smem, size = 0x4, offset = 0x4, fixed_abs, tag = 'smem constant byte address 0x4 - core index']
  #allocation1 [shape = 'u32[72,128]{1,0:T(1,128)}', space=vmem, size = 0x9000, scoped, tag = 'internal scratch']
  #allocation2 [shape = 'f32[16,1]{1,0:T(8,128)}', space=vmem, size = 0x2000, scoped, tag = 'scratch operand']
  #allocation3 [shape = 'f32[16,1]{1,0:T(8,128)}', space=vmem, size = 0x2000, scoped, tag = 'scratch operand']
  #allocation4 [shape = 'f32[16,1]{1,0:T(8,128)}', space=vmem, size = 0x2000, scoped, tag = 'scratch operand']
  #allocation5 [shape = 'f32[16,1]{1,0:T(8,128)}', space=vmem, size = 0x2000, scoped, tag = 'scratch operand']
  %s0 = inlined_call_operand.vmem [shape: f32[16,128], index: 0, kind: input, shape index: {}]
  %s1 = inlined_call_operand.vmem [shape: s32[16,1], index: 1, kind: input, shape index: {}]
  %s2 = inlined_call_operand.vmem [shape: f32[16,1], index: 2, kind: input, shape index: {}]
  %s3 = inlined_call_operand.hbm [shape: f32[1,1,16], index: 3, kind: output, shape index: {}]
  %s4 = sld [smem:[#allocation0]]
  $region30: #{tpu_custom_call.1} parent=0
    _
  %s6 = ssub.s32 1, %s4
  %s7 = scalar_select 0, %s6, %s4
  $region1: #{tpu_custom_call.1} parent=0
    #allocation6 [shape = 'u8[512]{0}', space=vmem, size = 0x400, scoped, tag = 'output window, operand 0, single buffered']
    #allocation7 [shape = 's32[1]{0}', space=sflag, size = 0x4, scoped, tag = 'scoped memory for tpu_custom_call.1']
    %8 = vsyncpa [#allocation7], 0
    // Predicated region
    $region2: #{tpu_custom_call.1} parent=1 // pred_check
      _
    $region3: #{tpu_custom_call.1} parent=1 // pred_check_branch
      %10 = sbr.rel (0) target = $region5
    $region4: #{tpu_custom_call.1} parent=1 // pred_region
      _
    $region5: #{tpu_custom_call.1} parent=1 // pred_fallthru
      _
    // Predicated region
    $region6: #{tpu_custom_call.1} parent=1 // pred_check
      _
    $region7: #{tpu_custom_call.1} parent=1 // pred_check_branch
      %12 = sbr.rel (0) target = $region9
    $region8: #{tpu_custom_call.1} parent=1 // pred_region
      _
    $region9: #{tpu_custom_call.1} parent=1 // pred_fallthru
      _
    // Predicated region
    $region10: #{tpu_custom_call.1} parent=1 // pred_check
      _
    $region11: #{tpu_custom_call.1} parent=1 // pred_check_branch
      %14 = sbr.rel (0) target = $region13
    $region12: #{tpu_custom_call.1} parent=1 // pred_region
      _
    $region13: #{tpu_custom_call.1} parent=1 // pred_fallthru
      _
    %p15 = scmp.eq.s32.totalorder 0, 0
    // Predicated region
    $region14: #{tpu_custom_call.1} parent=1 // pred_check
      %p16 = pneg %p15
    $region15: #{tpu_custom_call.1} parent=1 // pred_check_branch
      %18 = sbr.rel (%p16) target = $region17
    $region16: #{tpu_custom_call.1} parent=1 // pred_region
      %vm19 = vcmask 7168
      %20 = vst.msk [vmem:[#allocation2] sm:$0xff] %vm19, -1e+30
      %21 = vst.msk [vmem:[#allocation2 + $0x8] sm:$0xff] %vm19, -1e+30
      %22 = vst.msk [vmem:[#allocation3] sm:$0xff] %vm19, 0.0
      %23 = vst.msk [vmem:[#allocation3 + $0x8] sm:$0xff] %vm19, 0.0
      %24 = vst.msk [vmem:[#allocation4] sm:$0xff] %vm19, 0.0
      %25 = vst.msk [vmem:[#allocation4 + $0x8] sm:$0xff] %vm19, 0.0
      %26 = vst.msk [vmem:[#allocation5] sm:$0xff] %vm19, 0.0
      %27 = vst.msk [vmem:[#allocation5 + $0x8] sm:$0xff] %vm19, 0.0
    $region17: #{tpu_custom_call.1} parent=1 // pred_fallthru
      _
    %v28 = vld [vmem:[%s0] sm:$0xff]
    %v29 = vld [vmem:[%s0 + $0x8] sm:$0xff]
    %v30 = vld [vmem:[%s1] sm:$0xff]
    %v31 = vld [vmem:[%s1 + $0x8] sm:$0xff]
    %v32 = vlaneseq
    %v33 = vand.u32 %v32, 127
    %s34 = smul.u32 0, 128
    %v35 = vstv %s34
    %v36 = vadd.s32 %v33, %v35
    %v37 = vld [vmem:[#allocation2] sm:$0xff]
    %v38 = vld [vmem:[#allocation2 + $0x8] sm:$0xff]
    %39 = vmax.xlane.f32.xlu0 %v28
    %v40 = vpop.xlane.xlu0 %39
    %41 = vmax.xlane.f32.xlu0 %v29
    %v42 = vpop.xlane.xlu0 %41
    %v43 = vmax.f32 %v37, %v40
    %v44 = vmax.f32 %v38, %v42
    %v45 = vsub.f32 %v37, %v43
    %v46 = vsub.f32 %v38, %v44
    %v47 = vmul.f32 %v45, 1.442695
    %v48 = vpow.pop %v47
    %v49 = vmul.f32 %v46, 1.442695
    %v50 = vpow.pop %v49
    %52 = vset.pattern.permute.xlu0 0
    %53 = vperm.xlu0 %52, %v43
    %v54 = vpop.permute.xlu0 %53
    %57 = vset.pattern.permute.xlu0 0
    %58 = vperm.xlu0 %57, %v44
    %v59 = vpop.permute.xlu0 %58
    %v61 = vsub.f32 %v28, %v54
    %v62 = vsub.f32 %v29, %v59
    %v63 = vmul.f32 %v61, 1.442695
    %v64 = vpow.pop %v63
    %v65 = vmul.f32 %v62, 1.442695
    %v66 = vpow.pop %v65
    %67 = vadd.xlane.f32.xlu0 %v64
    %v68 = vpop.xlane.xlu0 %67
    %69 = vadd.xlane.f32.xlu0 %v66
    %v70 = vpop.xlane.xlu0 %69
    %v71 = vld [vmem:[#allocation3] sm:$0xff]
    %v72 = vld [vmem:[#allocation3 + $0x8] sm:$0xff]
    %v73 = vmul.f32 %v48, %v71
    %v74 = vmul.f32 %v50, %v72
    %v75 = vadd.f32 %v73, %v68
    %v76 = vadd.f32 %v74, %v70
    %vm77 = vcmask 7168
    %78 = vst.msk [vmem:[#allocation3] sm:$0xff] %vm77, %v75
    %79 = vst.msk [vmem:[#allocation3 + $0x8] sm:$0xff] %vm77, %v76
    %80 = vst.msk [vmem:[#allocation2] sm:$0xff] %vm77, %v43
    %81 = vst.msk [vmem:[#allocation2 + $0x8] sm:$0xff] %vm77, %v44
    %v82 = vld [vmem:[#allocation4] sm:$0xff]
    %v83 = vld [vmem:[#allocation4 + $0x8] sm:$0xff]
    %84 = vset.pattern.permute.xlu0 0
    %85 = vperm.xlu0 %84, %v30
    %v86 = vpop.permute.xlu0 %85
    %87 = vset.pattern.permute.xlu0 0
    %88 = vperm.xlu0 %87, %v31
    %v89 = vpop.permute.xlu0 %88
    %vm90 = vcmp.eq.s32.totalorder %v36, %v86
    %vm91 = vcmp.eq.s32.totalorder %v36, %v89
    %v92 = vsel %vm90, %v28, 0.0
    %v93 = vsel %vm91, %v29, 0.0
    %94 = vadd.xlane.f32.xlu0 %v92
    %v95 = vpop.xlane.xlu0 %94
    %96 = vadd.xlane.f32.xlu0 %v93
    %v97 = vpop.xlane.xlu0 %96
    %v98 = vadd.f32 %v82, %v95
    %v99 = vadd.f32 %v83, %v97
    %100 = vst.msk [vmem:[#allocation4] sm:$0xff] %vm77, %v98
    %101 = vst.msk [vmem:[#allocation4 + $0x8] sm:$0xff] %vm77, %v99
    // Predicated region
    $region18: #{tpu_custom_call.1} parent=1 // pred_check
      %p102 = pneg %p15
    $region19: #{tpu_custom_call.1} parent=1 // pred_check_branch
      %104 = sbr.rel (%p102) target = $region21
    $region20: #{tpu_custom_call.1} parent=1 // pred_region
      %v105 = vld [vmem:[#allocation2] sm:$0xff]
      %v106 = vld [vmem:[#allocation2 + $0x8] sm:$0xff]
      %v107 = vld [vmem:[#allocation3] sm:$0xff]
      %v108 = vld [vmem:[#allocation3 + $0x8] sm:$0xff]
      %v109 = vlog2.pop %v107
      %v110 = vmul.f32 %v109, 0.6931472
      %v111 = vlog2.pop %v108
      %v112 = vmul.f32 %v111, 0.6931472
      %v113 = vadd.f32 %v105, %v110
      %v114 = vadd.f32 %v106, %v112
      %v115 = vld [vmem:[#allocation4] sm:$0xff]
      %v116 = vld [vmem:[#allocation4 + $0x8] sm:$0xff]
      %v117 = vsub.f32 %v113, %v115
      %v118 = vsub.f32 %v114, %v116
      %v119 = vld [vmem:[%s2] sm:$0xff]
      %v120 = vld [vmem:[%s2 + $0x8] sm:$0xff]
      %v121 = vmul.f32 %v117, %v119
      %v122 = vmul.f32 %v118, %v120
      %v123 = vlaneseq
      %v124 = vshrl.u32 %v123, 7
      %v125 = vadd.s32 %v124, 8
      %vm126 = vcmp.eq.s32.totalorder %v124, %v33
      %vm127 = vcmp.eq.s32.totalorder %v125, %v33
      %129 = vset.pattern.permute.xlu0 0
      %130 = vperm.xlu0 %129, %v121
      %v131 = vpop.permute.xlu0 %130
      %134 = vset.pattern.permute.xlu0 0
      %135 = vperm.xlu0 %134, %v122
      %v136 = vpop.permute.xlu0 %135
      %v138 = vsel %vm126, %v131, 0.0
      %v139 = vsel %vm127, %v136, 0.0
      %vm140 = vcmask 130048
      %v141 = vsel %vm140, %v138, 0.0
      %v142 = vsel %vm140, %v139, 0.0
      %v143 = vadd.f32 %v141, %v142
      %v144 = vrot.slane %v143, 4
      %v145 = vadd.f32 %v143, %v144
      %v146 = vrot.slane %v145, 2
      %v147 = vadd.f32 %v145, %v146
      %v148 = vrot.slane %v147, 1
      %v149 = vadd.f32 %v147, %v148
      %vm150 = vcmask 122880
      %151 = vst.msk [vmem:[#allocation6] sm:$0x1] %vm150, %v149
    $region21: #{tpu_custom_call.1} parent=1 // pred_fallthru
      _
    // Predicated region
    $region22: #{tpu_custom_call.1} parent=1 // pred_check
      _
    $region23: #{tpu_custom_call.1} parent=1 // pred_check_branch
      %153 = sbr.rel (0) target = $region25
    $region24: #{tpu_custom_call.1} parent=1 // pred_region
      %155 = vsyncadd [#allocation7], 0
      %s157 = sshll.u32 [#allocation6], 4
      %s158 = int_to_ptr.vmem [resolvable:$true] %s157
      %s159 = sshll.u32 %s3, 4
      %s160 = int_to_ptr.hbm [resolvable:$true] %s159
      %162 = dma.vmem_to_hbm [thread:$0]  %s158, 16, %s160, [#allocation7]
    $region25: #{tpu_custom_call.1} parent=1 // pred_fallthru
      _
    // Predicated region
    $region26: #{tpu_custom_call.1} parent=1 // pred_check
      _
    $region27: #{tpu_custom_call.1} parent=1 // pred_check_branch
      %164 = sbr.rel (0) target = $region29
    $region28: #{tpu_custom_call.1} parent=1 // pred_region
      %166 = dma.done [#allocation7], 16
    $region29: #{tpu_custom_call.1} parent=1 // pred_fallthru
      _
    %167 = vsyncpa [#allocation7], 1

</llo_original>
